<compile_context>
chip_gen: v7x
topology: tpu7x:2x2x1
jax: 0.10.0
libtpu: 0.0.40
codegen_flags: <defaults>
</compile_context>

<pallas_src>
import jax
import jax.numpy as jnp
from jax.experimental import pallas as pl
from jax.experimental.pallas import tpu as pltpu


def _attack_mlp_kernel(xt_ref, w1_ref, b1_ref, w2_ref, b2_ref, w3_ref, b3_ref,
                       o_ref):
    # x tile: (C, TB) bf16 -- features on sublanes, batch on lanes (lane-dense).
    xt = xt_ref[...]

    # fc1 + bias + relu:  (256, C) @ (C, TB) -> (256, TB), f32 accumulation.
    # Epilogue is fused into one expression so the materialized (256, TB)
    # intermediate handed to fc2 is bf16 (half the VMEM/spill traffic).
    h1t = jnp.dot(w1_ref[...], xt, preferred_element_type=jnp.float32)
    h1t = jnp.maximum(h1t + b1_ref[...], 0.0).astype(jnp.bfloat16)
    # TODO(synk): dropout (training=True path) omitted — inference semantics.

    # fc2 + bias + relu:  (128, 256) @ (256, TB) -> (128, TB), f32.
    h2t = jnp.dot(w2_ref[...], h1t, preferred_element_type=jnp.float32)
    h2t = jnp.maximum(h2t + b2_ref[...], 0.0)

    # fc3 (out_features == 1): VPU multiply with the fc3 weight column + XLU
    # sublane reduce -> lane-dense (1, TB) logits row (no N=1 MXU matmul).
    logits = jnp.sum(h2t * w3_ref[...], axis=0, keepdims=True) + b3_ref[...]

    # sigmoid: exp on the EUP, approximate reciprocal instead of a VALU divide.
    o_ref[...] = pl.reciprocal(1.0 + jnp.exp(-logits), approx=True)


def _round_up(n, m):
    return ((n + m - 1) // m) * m


def attack_model_forward(x, params, *, block_b=4096):
    """x: (B, num_classes) float32.

    params use PyTorch nn.Linear layout: w* is (out, in), b* is (out,).
    Returns sigmoid probabilities of shape (B, 1), eval-mode forward.
    """
    B, num_classes = x.shape

    # Matmul weights pre-cast to bf16 (half the HBM/VMEM bytes, full-rate MXU);
    # fc3 row and all biases stay f32 for the VPU/EUP epilogue.
    w1 = params["w1"].astype(jnp.bfloat16)                   # (256, C)
    w2 = params["w2"].astype(jnp.bfloat16)                   # (128, 256)
    b1 = params["b1"].reshape(-1, 1).astype(jnp.float32)     # (256, 1)
    b2 = params["b2"].reshape(-1, 1).astype(jnp.float32)     # (128, 1)
    w3 = params["w3"].reshape(-1, 1).astype(jnp.float32)     # (128, 1)
    b3 = params["b3"].reshape(1, 1).astype(jnp.float32)      # (1, 1)

    # Batch tile: multiple of 128 (lane-dense output row).  Once B > 128, cap
    # the tile so there are >= 2 grid steps (both v7x TensorCores get work).
    tb = _round_up(B, 128)
    if B > 128:
        tb = min(tb, _round_up(pl.cdiv(B, 2), 128))
    tb = min(tb, block_b)

    num_tiles = pl.cdiv(B, tb)
    b_pad = num_tiles * tb

    # Pre-transpose x to (C, B): the tile is lane-dense on the batch axis and
    # fc1 becomes a plain (256,C)@(C,TB) dot (no in-kernel relayout).  The
    # one-off HBM transpose of a (B, ~10) array is negligible.
    xt = x.T.astype(jnp.bfloat16)                            # (C, B)
    if b_pad != B:
        xt = jnp.pad(xt, ((0, 0), (0, b_pad - B)))

    resident = lambda shape: pl.BlockSpec(shape, lambda i: (0, 0))

    out = pl.pallas_call(
        _attack_mlp_kernel,
        out_shape=jax.ShapeDtypeStruct((1, b_pad), jnp.float32),
        grid=(num_tiles,),
        in_specs=[
            pl.BlockSpec((num_classes, tb), lambda i: (0, i)),   # x batch tile
            resident(w1.shape), resident(b1.shape),              # VMEM-resident
            resident(w2.shape), resident(b2.shape),
            resident(w3.shape), resident(b3.shape),
        ],
        out_specs=pl.BlockSpec((1, tb), lambda i: (0, i)),        # lane-dense
        compiler_params=pltpu.CompilerParams(
            dimension_semantics=("parallel",)),
    )(xt, w1, b1, w2, b2, w3, b3)

    return out.reshape(b_pad, 1)[:B]


def init_params(num_classes: int, key):
    """Deterministic synthetic parameters, PyTorch nn.Linear layout."""
    k1, k2, k3 = jax.random.split(key, 3)

    def lin(k, fan_in, fan_out):
        bound = 1.0 / jnp.sqrt(fan_in)
        kw, kb = jax.random.split(k)
        w = jax.random.uniform(kw, (fan_out, fan_in), jnp.float32, -bound, bound)
        b = jax.random.uniform(kb, (fan_out,), jnp.float32, -bound, bound)
        return w, b

    w1, b1 = lin(k1, num_classes, 256)
    w2, b2 = lin(k2, 256, 128)
    w3, b3 = lin(k3, 128, 1)
    return dict(w1=w1, b1=b1, w2=w2, b2=b2, w3=w3, b3=b3)


if __name__ == "__main__":
    num_classes = 10
    batch = 8

    key = jax.random.PRNGKey(0)
    kx, kp = jax.random.split(key)
    x = jax.random.normal(kx, (batch, num_classes), jnp.float32)
    params = init_params(num_classes, kp)

    out = attack_model_forward(x, params)
    out = jax.block_until_ready(out)

    # Reference (eval-mode forward) with matching bf16 matmul operands.
    w1b = params["w1"].astype(jnp.bfloat16)
    w2b = params["w2"].astype(jnp.bfloat16)
    h1 = jnp.maximum(
        jnp.dot(x.astype(jnp.bfloat16), w1b.T,
                preferred_element_type=jnp.float32) + params["b1"][None, :], 0.0)
    h2 = jnp.maximum(
        jnp.dot(h1.astype(jnp.bfloat16), w2b.T,
                preferred_element_type=jnp.float32) + params["b2"][None, :], 0.0)
    ref = jax.nn.sigmoid(h2 @ params["w3"].T + params["b3"][None, :])

    assert out.shape == (batch, 1)
    assert jnp.allclose(out, ref, atol=5e-3), "mismatch vs reference"

    print("KERNEL_OK")
</pallas_src>

<mosaic_0001>
module attributes {stable_mosaic.version = 11 : i64} {
  func.func @_attack_mlp_kernel(%arg0: i32, %arg1: memref<10x128xbf16, #tpu.memory_space<vmem>>, %arg2: memref<256x10xbf16, #tpu.memory_space<vmem>>, %arg3: memref<256x1xf32, #tpu.memory_space<vmem>>, %arg4: memref<128x256xbf16, #tpu.memory_space<vmem>>, %arg5: memref<128x1xf32, #tpu.memory_space<vmem>>, %arg6: memref<128x1xf32, #tpu.memory_space<vmem>>, %arg7: memref<1x1xf32, #tpu.memory_space<vmem>>, %arg8: memref<1x128xf32, #tpu.memory_space<vmem>>) attributes {dimension_semantics = [#tpu.dimension_semantics<parallel>], iteration_bounds = array<i64: 1>, scalar_prefetch = 0 : i64, scratch_operands = 0 : i64, tpu.core_type = #tpu.core_type<tc>, window_params = [{transform_indices = @transform_0, window_bounds = array<i64: 10, 128>}, {pipeline_mode = #tpu.pipeline_mode<synchronous>, transform_indices = @transform_1, window_bounds = array<i64: 256, 10>}, {pipeline_mode = #tpu.pipeline_mode<synchronous>, transform_indices = @transform_2, window_bounds = array<i64: 256, 1>}, {pipeline_mode = #tpu.pipeline_mode<synchronous>, transform_indices = @transform_3, window_bounds = array<i64: 128, 256>}, {pipeline_mode = #tpu.pipeline_mode<synchronous>, transform_indices = @transform_4, window_bounds = array<i64: 128, 1>}, {pipeline_mode = #tpu.pipeline_mode<synchronous>, transform_indices = @transform_5, window_bounds = array<i64: 128, 1>}, {pipeline_mode = #tpu.pipeline_mode<synchronous>, transform_indices = @transform_6, window_bounds = array<i64: 1, 1>}, {transform_indices = @transform_7, window_bounds = array<i64: 1, 128>}]} {
    %c0 = arith.constant 0 : index
    %c0_0 = arith.constant 0 : index
    %0 = vector.load %arg1[%c0, %c0_0] : memref<10x128xbf16, #tpu.memory_space<vmem>>, vector<10x128xbf16>
    %c0_1 = arith.constant 0 : index
    %c0_2 = arith.constant 0 : index
    %1 = vector.load %arg2[%c0_1, %c0_2] : memref<256x10xbf16, #tpu.memory_space<vmem>>, vector<256x10xbf16>
    %cst = arith.constant dense<0.000000e+00> : vector<256x128xf32>
    %2 = tpu.matmul %1, %0, %cst {dimension_numbers = #tpu.dot_dimension_numbers<[1], [0], [0], [1], [0, 0, 1, 1], [], []>} : vector<256x10xbf16>, vector<10x128xbf16>, vector<256x128xf32> -> vector<256x128xf32>
    %c0_3 = arith.constant 0 : index
    %c0_4 = arith.constant 0 : index
    %3 = vector.load %arg3[%c0_3, %c0_4] : memref<256x1xf32, #tpu.memory_space<vmem>>, vector<256x1xf32>
    %4 = vector.broadcast %3 : vector<256x1xf32> to vector<256x128xf32>
    %5 = arith.addf %2, %4 : vector<256x128xf32>
    %cst_5 = arith.constant 0.000000e+00 : f32
    %6 = vector.broadcast %cst_5 : f32 to vector<256x128xf32>
    %7 = arith.maximumf %5, %6 : vector<256x128xf32>
    %8 = arith.truncf %7 : vector<256x128xf32> to vector<256x128xbf16>
    %c0_6 = arith.constant 0 : index
    %c0_7 = arith.constant 0 : index
    %9 = vector.load %arg4[%c0_6, %c0_7] : memref<128x256xbf16, #tpu.memory_space<vmem>>, vector<128x256xbf16>
    %cst_8 = arith.constant dense<0.000000e+00> : vector<128x128xf32>
    %10 = tpu.matmul %9, %8, %cst_8 {dimension_numbers = #tpu.dot_dimension_numbers<[1], [0], [0], [1], [0, 0, 1, 1], [], []>} : vector<128x256xbf16>, vector<256x128xbf16>, vector<128x128xf32> -> vector<128x128xf32>
    %c0_9 = arith.constant 0 : index
    %c0_10 = arith.constant 0 : index
    %11 = vector.load %arg5[%c0_9, %c0_10] : memref<128x1xf32, #tpu.memory_space<vmem>>, vector<128x1xf32>
    %12 = vector.broadcast %11 : vector<128x1xf32> to vector<128x128xf32>
    %13 = arith.addf %10, %12 : vector<128x128xf32>
    %cst_11 = arith.constant 0.000000e+00 : f32
    %14 = vector.broadcast %cst_11 : f32 to vector<128x128xf32>
    %15 = arith.maximumf %13, %14 : vector<128x128xf32>
    %c0_12 = arith.constant 0 : index
    %c0_13 = arith.constant 0 : index
    %16 = vector.load %arg6[%c0_12, %c0_13] : memref<128x1xf32, #tpu.memory_space<vmem>>, vector<128x1xf32>
    %17 = vector.broadcast %16 : vector<128x1xf32> to vector<128x128xf32>
    %18 = arith.mulf %15, %17 : vector<128x128xf32>
    %cst_14 = arith.constant dense<0.000000e+00> : vector<128xf32>
    %19 = vector.multi_reduction <add>, %18, %cst_14 [0] : vector<128x128xf32> to vector<128xf32>
    %20 = vector.shape_cast %19 : vector<128xf32> to vector<1x128xf32>
    %c0_15 = arith.constant 0 : index
    %c0_16 = arith.constant 0 : index
    %21 = vector.load %arg7[%c0_15, %c0_16] : memref<1x1xf32, #tpu.memory_space<vmem>>, vector<1x1xf32>
    %22 = vector.broadcast %21 : vector<1x1xf32> to vector<1x128xf32>
    %23 = arith.addf %20, %22 : vector<1x128xf32>
    %cst_17 = arith.constant 0.000000e+00 : f32
    %24 = vector.broadcast %cst_17 : f32 to vector<1x128xf32>
    %25 = arith.subf %24, %23 : vector<1x128xf32>
    %26 = math.exp %25 : vector<1x128xf32>
    %cst_18 = arith.constant 1.000000e+00 : f32
    %27 = vector.broadcast %cst_18 : f32 to vector<1x128xf32>
    %28 = arith.addf %27, %26 : vector<1x128xf32>
    %29 = tpu.reciprocal %28 {approx = true} : vector<1x128xf32> -> vector<1x128xf32>
    %c0_19 = arith.constant 0 : index
    %c0_20 = arith.constant 0 : index
    %30 = vector.load %arg8[%c0_19, %c0_20] : memref<1x128xf32, #tpu.memory_space<vmem>>, vector<1x128xf32>
    tpu.vector_store %arg8[%c0_19, %c0_20], %29 {strides = array<i32>} : memref<1x128xf32, #tpu.memory_space<vmem>>, vector<1x128xf32>,
    return
  }
  func.func @transform_0(%arg0: i32) -> (i32, i32) {
    %c0_i32 = arith.constant 0 : i32
    %c0_i32_0 = arith.constant 0 : i32
    return %c0_i32, %arg0 : i32, i32
  }
  func.func @transform_1(%arg0: i32) -> (i32, i32) {
    %c0_i32 = arith.constant 0 : i32
    %c0_i32_0 = arith.constant 0 : i32
    %c0_i32_1 = arith.constant 0 : i32
    return %c0_i32, %c0_i32_0 : i32, i32
  }
  func.func @transform_2(%arg0: i32) -> (i32, i32) {
    %c0_i32 = arith.constant 0 : i32
    %c0_i32_0 = arith.constant 0 : i32
    %c0_i32_1 = arith.constant 0 : i32
    return %c0_i32, %c0_i32_0 : i32, i32
  }
  func.func @transform_3(%arg0: i32) -> (i32, i32) {
    %c0_i32 = arith.constant 0 : i32
    %c0_i32_0 = arith.constant 0 : i32
    %c0_i32_1 = arith.constant 0 : i32
    return %c0_i32, %c0_i32_0 : i32, i32
  }
  func.func @transform_4(%arg0: i32) -> (i32, i32) {
    %c0_i32 = arith.constant 0 : i32
    %c0_i32_0 = arith.constant 0 : i32
    %c0_i32_1 = arith.constant 0 : i32
    return %c0_i32, %c0_i32_0 : i32, i32
  }
  func.func @transform_5(%arg0: i32) -> (i32, i32) {
    %c0_i32 = arith.constant 0 : i32
    %c0_i32_0 = arith.constant 0 : i32
    %c0_i32_1 = arith.constant 0 : i32
    return %c0_i32, %c0_i32_0 : i32, i32
  }
  func.func @transform_6(%arg0: i32) -> (i32, i32) {
    %c0_i32 = arith.constant 0 : i32
    %c0_i32_0 = arith.constant 0 : i32
    %c0_i32_1 = arith.constant 0 : i32
    return %c0_i32, %c0_i32_0 : i32, i32
  }
  func.func @transform_7(%arg0: i32) -> (i32, i32) {
    %c0_i32 = arith.constant 0 : i32
    %c0_i32_0 = arith.constant 0 : i32
    return %c0_i32, %arg0 : i32, i32
  }
}

</mosaic_0001>

<llo_original>
// kernel: tpu_custom_call.1
$region0: #{tpu_custom_call.1}
  #allocation0 [shape = 'u32[]', space=smem, size = 0x4, offset = 0x4, fixed_abs, tag = 'smem constant byte address 0x4 - core index']
  #allocation1 [shape = 'u32[144,128]{1,0:T(1,128)}', space=vmem, size = 0x12000, scoped, tag = 'internal scratch']
  #allocation2 [shape = 'f32[1,1]{1,0:T(1,128)S(1)}', space=vmem, size = 0x200, scoped, tag = 'scoped memory for tpu_custom_call.1']
  %s0 = inlined_call_operand.vmem [shape: bf16[10,128], index: 0, kind: input, shape index: {}]
  %s1 = inlined_call_operand.vmem [shape: bf16[256,10], index: 1, kind: input, shape index: {}]
  %s2 = inlined_call_operand.vmem [shape: f32[256,1], index: 2, kind: input, shape index: {}]
  %s3 = inlined_call_operand.vmem [shape: bf16[128,256], index: 3, kind: input, shape index: {}]
  %s4 = inlined_call_operand.vmem [shape: f32[128,1], index: 4, kind: input, shape index: {}]
  %s5 = inlined_call_operand.vmem [shape: f32[128,1], index: 5, kind: input, shape index: {}]
  %s6 = inlined_call_operand.<no memory space> [shape: f32[1,1], index: 6, kind: input, shape index: {}]
  %s7 = inlined_call_operand.hbm [shape: f32[1,128], index: 7, kind: output, shape index: {}]
  %s8 = sld [smem:[#allocation0]]
  $region38: #{tpu_custom_call.1} parent=0
    _
  %s10 = ssub.s32 1, %s8
  %s11 = scalar_select 0, %s10, %s8
  %v12 = vstv %s6
  %13 = vst [vmem:[#allocation2] sm:$0x1] %v12
  $region1: #{tpu_custom_call.1} parent=0
    #allocation3 [shape = 'u8[512]{0}', space=vmem, size = 0x400, scoped, tag = 'output window, operand 0, single buffered']
    #allocation4 [shape = 's32[1]{0}', space=sflag, size = 0x4, scoped, tag = 'scoped memory for tpu_custom_call.1']
    %14 = vsyncpa [#allocation4], 0
    // Predicated region
    $region2: #{tpu_custom_call.1} parent=1 // pred_check
      _
    $region3: #{tpu_custom_call.1} parent=1 // pred_check_branch
      %16 = sbr.rel (0) target = $region5
    $region4: #{tpu_custom_call.1} parent=1 // pred_region
      _
    $region5: #{tpu_custom_call.1} parent=1 // pred_fallthru
      _
    // Predicated region
    $region6: #{tpu_custom_call.1} parent=1 // pred_check
      _
    $region7: #{tpu_custom_call.1} parent=1 // pred_check_branch
      %18 = sbr.rel (0) target = $region9
    $region8: #{tpu_custom_call.1} parent=1 // pred_region
      _
    $region9: #{tpu_custom_call.1} parent=1 // pred_fallthru
      _
    // Predicated region
    $region10: #{tpu_custom_call.1} parent=1 // pred_check
      _
    $region11: #{tpu_custom_call.1} parent=1 // pred_check_branch
      %20 = sbr.rel (0) target = $region13
    $region12: #{tpu_custom_call.1} parent=1 // pred_region
      _
    $region13: #{tpu_custom_call.1} parent=1 // pred_fallthru
      _
    // Predicated region
    $region14: #{tpu_custom_call.1} parent=1 // pred_check
      _
    $region15: #{tpu_custom_call.1} parent=1 // pred_check_branch
      %22 = sbr.rel (0) target = $region17
    $region16: #{tpu_custom_call.1} parent=1 // pred_region
      _
    $region17: #{tpu_custom_call.1} parent=1 // pred_fallthru
      _
    // Predicated region
    $region18: #{tpu_custom_call.1} parent=1 // pred_check
      _
    $region19: #{tpu_custom_call.1} parent=1 // pred_check_branch
      %24 = sbr.rel (0) target = $region21
    $region20: #{tpu_custom_call.1} parent=1 // pred_region
      _
    $region21: #{tpu_custom_call.1} parent=1 // pred_fallthru
      _
    // Predicated region
    $region22: #{tpu_custom_call.1} parent=1 // pred_check
      _
    $region23: #{tpu_custom_call.1} parent=1 // pred_check_branch
      %26 = sbr.rel (0) target = $region25
    $region24: #{tpu_custom_call.1} parent=1 // pred_region
      _
    $region25: #{tpu_custom_call.1} parent=1 // pred_fallthru
      _
    // Predicated region
    $region26: #{tpu_custom_call.1} parent=1 // pred_check
      _
    $region27: #{tpu_custom_call.1} parent=1 // pred_check_branch
      %28 = sbr.rel (0) target = $region29
    $region28: #{tpu_custom_call.1} parent=1 // pred_region
      _
    $region29: #{tpu_custom_call.1} parent=1 // pred_fallthru
      _
    %v30 = vld [vmem:[%s0] sm:$0xf]
    %v31 = vld [vmem:[%s0 + $0x4] sm:$0x1]
    %v32 = vld [vmem:[%s1] sm:$0xf]
    %v33 = vld [vmem:[%s1 + $0x4] sm:$0xf]
    %v34 = vld [vmem:[%s1 + $0x8] sm:$0xf]
    %v35 = vld [vmem:[%s1 + $0xc] sm:$0xf]
    %v36 = vld [vmem:[%s1 + $0x10] sm:$0xf]
    %v37 = vld [vmem:[%s1 + $0x14] sm:$0xf]
    %v38 = vld [vmem:[%s1 + $0x18] sm:$0xf]
    %v39 = vld [vmem:[%s1 + $0x1c] sm:$0xf]
    %v40 = vld [vmem:[%s1 + $0x20] sm:$0xf]
    %v41 = vld [vmem:[%s1 + $0x24] sm:$0xf]
    %v42 = vld [vmem:[%s1 + $0x28] sm:$0xf]
    %v43 = vld [vmem:[%s1 + $0x2c] sm:$0xf]
    %v44 = vld [vmem:[%s1 + $0x30] sm:$0xf]
    %v45 = vld [vmem:[%s1 + $0x34] sm:$0xf]
    %v46 = vld [vmem:[%s1 + $0x38] sm:$0xf]
    %v47 = vld [vmem:[%s1 + $0x3c] sm:$0xf]
    %v48 = vld [vmem:[%s1 + $0x40] sm:$0xf]
    %v49 = vld [vmem:[%s1 + $0x44] sm:$0xf]
    %v50 = vld [vmem:[%s1 + $0x48] sm:$0xf]
    %v51 = vld [vmem:[%s1 + $0x4c] sm:$0xf]
    %v52 = vld [vmem:[%s1 + $0x50] sm:$0xf]
    %v53 = vld [vmem:[%s1 + $0x54] sm:$0xf]
    %v54 = vld [vmem:[%s1 + $0x58] sm:$0xf]
    %v55 = vld [vmem:[%s1 + $0x5c] sm:$0xf]
    %v56 = vld [vmem:[%s1 + $0x60] sm:$0xf]
    %v57 = vld [vmem:[%s1 + $0x64] sm:$0xf]
    %v58 = vld [vmem:[%s1 + $0x68] sm:$0xf]
    %v59 = vld [vmem:[%s1 + $0x6c] sm:$0xf]
    %v60 = vld [vmem:[%s1 + $0x70] sm:$0xf]
    %v61 = vld [vmem:[%s1 + $0x74] sm:$0xf]
    %v62 = vld [vmem:[%s1 + $0x78] sm:$0xf]
    %v63 = vld [vmem:[%s1 + $0x7c] sm:$0xf]
    %v64 = vld [vmem:[%s2] sm:$0xff]
    %v65 = vld [vmem:[%s2 + $0x8] sm:$0xff]
    %v66 = vld [vmem:[%s2 + $0x10] sm:$0xff]
    %v67 = vld [vmem:[%s2 + $0x18] sm:$0xff]
    %v68 = vld [vmem:[%s2 + $0x20] sm:$0xff]
    %v69 = vld [vmem:[%s2 + $0x28] sm:$0xff]
    %v70 = vld [vmem:[%s2 + $0x30] sm:$0xff]
    %v71 = vld [vmem:[%s2 + $0x38] sm:$0xff]
    %v72 = vld [vmem:[%s2 + $0x40] sm:$0xff]
    %v73 = vld [vmem:[%s2 + $0x48] sm:$0xff]
    %v74 = vld [vmem:[%s2 + $0x50] sm:$0xff]
    %v75 = vld [vmem:[%s2 + $0x58] sm:$0xff]
    %v76 = vld [vmem:[%s2 + $0x60] sm:$0xff]
    %v77 = vld [vmem:[%s2 + $0x68] sm:$0xff]
    %v78 = vld [vmem:[%s2 + $0x70] sm:$0xff]
    %v79 = vld [vmem:[%s2 + $0x78] sm:$0xff]
    %v80 = vld [vmem:[%s2 + $0x80] sm:$0xff]
    %v81 = vld [vmem:[%s2 + $0x88] sm:$0xff]
    %v82 = vld [vmem:[%s2 + $0x90] sm:$0xff]
    %v83 = vld [vmem:[%s2 + $0x98] sm:$0xff]
    %v84 = vld [vmem:[%s2 + $0xa0] sm:$0xff]
    %v85 = vld [vmem:[%s2 + $0xa8] sm:$0xff]
    %v86 = vld [vmem:[%s2 + $0xb0] sm:$0xff]
    %v87 = vld [vmem:[%s2 + $0xb8] sm:$0xff]
    %v88 = vld [vmem:[%s2 + $0xc0] sm:$0xff]
    %v89 = vld [vmem:[%s2 + $0xc8] sm:$0xff]
    %v90 = vld [vmem:[%s2 + $0xd0] sm:$0xff]
    %v91 = vld [vmem:[%s2 + $0xd8] sm:$0xff]
    %v92 = vld [vmem:[%s2 + $0xe0] sm:$0xff]
    %v93 = vld [vmem:[%s2 + $0xe8] sm:$0xff]
    %v94 = vld [vmem:[%s2 + $0xf0] sm:$0xff]
    %v95 = vld [vmem:[%s2 + $0xf8] sm:$0xff]
    %97 = vset.pattern.permute.xlu0 0
    %98 = vperm.xlu0 %97, %v64
    %v99 = vpop.permute.xlu0 %98
    %102 = vset.pattern.permute.xlu0 0
    %103 = vperm.xlu0 %102, %v65
    %v104 = vpop.permute.xlu0 %103
    %107 = vset.pattern.permute.xlu0 0
    %108 = vperm.xlu0 %107, %v66
    %v109 = vpop.permute.xlu0 %108
    %112 = vset.pattern.permute.xlu0 0
    %113 = vperm.xlu0 %112, %v67
    %v114 = vpop.permute.xlu0 %113
    %117 = vset.pattern.permute.xlu0 0
    %118 = vperm.xlu0 %117, %v68
    %v119 = vpop.permute.xlu0 %118
    %122 = vset.pattern.permute.xlu0 0
    %123 = vperm.xlu0 %122, %v69
    %v124 = vpop.permute.xlu0 %123
    %127 = vset.pattern.permute.xlu0 0
    %128 = vperm.xlu0 %127, %v70
    %v129 = vpop.permute.xlu0 %128
    %132 = vset.pattern.permute.xlu0 0
    %133 = vperm.xlu0 %132, %v71
    %v134 = vpop.permute.xlu0 %133
    %137 = vset.pattern.permute.xlu0 0
    %138 = vperm.xlu0 %137, %v72
    %v139 = vpop.permute.xlu0 %138
    %142 = vset.pattern.permute.xlu0 0
    %143 = vperm.xlu0 %142, %v73
    %v144 = vpop.permute.xlu0 %143
    %147 = vset.pattern.permute.xlu0 0
    %148 = vperm.xlu0 %147, %v74
    %v149 = vpop.permute.xlu0 %148
    %152 = vset.pattern.permute.xlu0 0
    %153 = vperm.xlu0 %152, %v75
    %v154 = vpop.permute.xlu0 %153
    %157 = vset.pattern.permute.xlu0 0
    %158 = vperm.xlu0 %157, %v76
    %v159 = vpop.permute.xlu0 %158
    %162 = vset.pattern.permute.xlu0 0
    %163 = vperm.xlu0 %162, %v77
    %v164 = vpop.permute.xlu0 %163
    %167 = vset.pattern.permute.xlu0 0
    %168 = vperm.xlu0 %167, %v78
    %v169 = vpop.permute.xlu0 %168
    %172 = vset.pattern.permute.xlu0 0
    %173 = vperm.xlu0 %172, %v79
    %v174 = vpop.permute.xlu0 %173
    %177 = vset.pattern.permute.xlu0 0
    %178 = vperm.xlu0 %177, %v80
    %v179 = vpop.permute.xlu0 %178
    %182 = vset.pattern.permute.xlu0 0
    %183 = vperm.xlu0 %182, %v81
    %v184 = vpop.permute.xlu0 %183
    %187 = vset.pattern.permute.xlu0 0
    %188 = vperm.xlu0 %187, %v82
    %v189 = vpop.permute.xlu0 %188
    %192 = vset.pattern.permute.xlu0 0
    %193 = vperm.xlu0 %192, %v83
    %v194 = vpop.permute.xlu0 %193
    %197 = vset.pattern.permute.xlu0 0
    %198 = vperm.xlu0 %197, %v84
    %v199 = vpop.permute.xlu0 %198
    %202 = vset.pattern.permute.xlu0 0
    %203 = vperm.xlu0 %202, %v85
    %v204 = vpop.permute.xlu0 %203
    %207 = vset.pattern.permute.xlu0 0
    %208 = vperm.xlu0 %207, %v86
    %v209 = vpop.permute.xlu0 %208
    %212 = vset.pattern.permute.xlu0 0
    %213 = vperm.xlu0 %212, %v87
    %v214 = vpop.permute.xlu0 %213
    %217 = vset.pattern.permute.xlu0 0
    %218 = vperm.xlu0 %217, %v88
    %v219 = vpop.permute.xlu0 %218
    %222 = vset.pattern.permute.xlu0 0
    %223 = vperm.xlu0 %222, %v89
    %v224 = vpop.permute.xlu0 %223
    %227 = vset.pattern.permute.xlu0 0
    %228 = vperm.xlu0 %227, %v90
    %v229 = vpop.permute.xlu0 %228
    %232 = vset.pattern.permute.xlu0 0
    %233 = vperm.xlu0 %232, %v91
    %v234 = vpop.permute.xlu0 %233
    %237 = vset.pattern.permute.xlu0 0
    %238 = vperm.xlu0 %237, %v92
    %v239 = vpop.permute.xlu0 %238
    %242 = vset.pattern.permute.xlu0 0
    %243 = vperm.xlu0 %242, %v93
    %v244 = vpop.permute.xlu0 %243
    %247 = vset.pattern.permute.xlu0 0
    %248 = vperm.xlu0 %247, %v94
    %v249 = vpop.permute.xlu0 %248
    %252 = vset.pattern.permute.xlu0 0
    %253 = vperm.xlu0 %252, %v95
    %v254 = vpop.permute.xlu0 %253
    %v288 = vunpack.c.l.b16 %v32
    %v289 = vunpack.c.l.b16 %v33
    %v290 = vunpack.c.l.b16 %v34
    %v291 = vunpack.c.l.b16 %v35
    %v292 = vunpack.c.l.b16 %v36
    %v293 = vunpack.c.l.b16 %v37
    %v294 = vunpack.c.l.b16 %v38
    %v295 = vunpack.c.l.b16 %v39
    %v296 = vunpack.c.l.b16 %v40
    %v297 = vunpack.c.l.b16 %v41
    %v298 = vunpack.c.l.b16 %v42
    %v299 = vunpack.c.l.b16 %v43
    %v300 = vunpack.c.l.b16 %v44
    %v301 = vunpack.c.l.b16 %v45
    %v302 = vunpack.c.l.b16 %v46
    %v303 = vunpack.c.l.b16 %v47
    %v304 = vunpack.c.l.b16 %v48
    %v305 = vunpack.c.l.b16 %v49
    %v306 = vunpack.c.l.b16 %v50
    %v307 = vunpack.c.l.b16 %v51
    %v308 = vunpack.c.l.b16 %v52
    %v309 = vunpack.c.l.b16 %v53
    %v310 = vunpack.c.l.b16 %v54
    %v311 = vunpack.c.l.b16 %v55
    %v312 = vunpack.c.l.b16 %v56
    %v313 = vunpack.c.l.b16 %v57
    %v314 = vunpack.c.l.b16 %v58
    %v315 = vunpack.c.l.b16 %v59
    %v316 = vunpack.c.l.b16 %v60
    %v317 = vunpack.c.l.b16 %v61
    %v318 = vunpack.c.l.b16 %v62
    %v319 = vunpack.c.l.b16 %v63
    %v320 = vpack.c.b16 %v289, %v288
    %v321 = vpack.c.b16 %v291, %v290
    %v322 = vpack.c.b16 %v293, %v292
    %v323 = vpack.c.b16 %v295, %v294
    %v324 = vpack.c.b16 %v297, %v296
    %v325 = vpack.c.b16 %v299, %v298
    %v326 = vpack.c.b16 %v301, %v300
    %v327 = vpack.c.b16 %v303, %v302
    %v328 = vpack.c.b16 %v305, %v304
    %v329 = vpack.c.b16 %v307, %v306
    %v330 = vpack.c.b16 %v309, %v308
    %v331 = vpack.c.b16 %v311, %v310
    %v332 = vpack.c.b16 %v313, %v312
    %v333 = vpack.c.b16 %v315, %v314
    %v334 = vpack.c.b16 %v317, %v316
    %v335 = vpack.c.b16 %v319, %v318
    %v338 = vunpack.c.l.b16 %v30
    %v339 = vunpack.c.l.b16 %v31
    %v340 = vpack.c.b16 %v339, %v338
    %vm341 = vcmask 80896
    %v343 = vsel %vm341, %v320, 0
    %v346 = vsel %vm341, %v321, 0
    %v349 = vsel %vm341, %v322, 0
    %v352 = vsel %vm341, %v323, 0
    %v355 = vsel %vm341, %v324, 0
    %v358 = vsel %vm341, %v325, 0
    %v361 = vsel %vm341, %v326, 0
    %v364 = vsel %vm341, %v327, 0
    %v367 = vsel %vm341, %v328, 0
    %v370 = vsel %vm341, %v329, 0
    %v373 = vsel %vm341, %v330, 0
    %v376 = vsel %vm341, %v331, 0
    %v379 = vsel %vm341, %v332, 0
    %v382 = vsel %vm341, %v333, 0
    %v385 = vsel %vm341, %v334, 0
    %v388 = vsel %vm341, %v335, 0
    %vm390 = vcmask 1044480
    %v392 = vsel %vm390, %v340, 0
    %394 = vmatprep.subr.bf16.mxu0 0
    %395 = vmatpush1.bf16.msra.mxu0 %v392
    %396 = vmatprep.subr.bf16.mxu0 0
    %397 = vmatpush1.bf16.msra.mxu0 0
    %398 = vmatprep.subr.bf16.mxu0 0
    %399 = vmatpush1.bf16.msra.mxu0 0
    %400 = vmatprep.subr.bf16.mxu0 0
    %401 = vmatpush1.bf16.msra.mxu0 0
    %402 = vmatprep.subr.bf16.mxu0 0
    %403 = vmatpush1.bf16.msra.mxu0 0
    %404 = vmatprep.subr.bf16.mxu0 0
    %405 = vmatpush1.bf16.msra.mxu0 0
    %406 = vmatprep.subr.bf16.mxu0 0
    %407 = vmatpush1.bf16.msra.mxu0 0
    %408 = vmatprep.subr.bf16.mxu0 0
    %409 = vmatpush1.bf16.msra.mxu0 0
    %410 = vmatprep.subr.bf16.mxu0 0
    %411 = vmatpush1.bf16.msra.mxu0 0
    %412 = vmatprep.subr.bf16.mxu0 0
    %413 = vmatpush1.bf16.msra.mxu0 0
    %414 = vmatprep.subr.bf16.mxu0 0
    %415 = vmatpush1.bf16.msra.mxu0 0
    %416 = vmatprep.subr.bf16.mxu0 0
    %417 = vmatpush1.bf16.msra.mxu0 0
    %418 = vmatprep.subr.bf16.mxu0 0
    %419 = vmatpush1.bf16.msra.mxu0 0
    %420 = vmatprep.subr.bf16.mxu0 0
    %421 = vmatpush1.bf16.msra.mxu0 0
    %422 = vmatprep.subr.bf16.mxu0 0
    %423 = vmatpush1.bf16.msra.mxu0 0
    %424 = vmatprep.subr.bf16.mxu0 0
    %425 = vmatpush1.bf16.msra.mxu0 0
    %426 = vmatprep.mubr.bf16.mxu0 0
    %427 = vmatmul.mubr.bf16.gmra.mrb[0].mxu0 %v343
    %v428 = vpop.f32.mrb[0].mxu0
    %v429 = vadd.f32 %v99, %v428
    %v430 = vpop.f32.mrb[0].mxu0
    %v431 = vpop.f32.mrb[0].mxu0
    %v432 = vadd.f32 %v104, %v431
    %v433 = vpop.f32.mrb[0].mxu0
    %434 = vmatprep.mubr.bf16.mxu0 0
    %435 = vmatmul.mubr.bf16.gmra.mrb[0].mxu0 %v346
    %v436 = vpop.f32.mrb[0].mxu0
    %v437 = vadd.f32 %v109, %v436
    %v438 = vpop.f32.mrb[0].mxu0
    %v439 = vpop.f32.mrb[0].mxu0
    %v440 = vadd.f32 %v114, %v439
    %v441 = vpop.f32.mrb[0].mxu0
    %442 = vmatprep.mubr.bf16.mxu0 0
    %443 = vmatmul.mubr.bf16.gmra.mrb[0].mxu0 %v349
    %v444 = vpop.f32.mrb[0].mxu0
    %v445 = vadd.f32 %v119, %v444
    %v446 = vpop.f32.mrb[0].mxu0
    %v447 = vpop.f32.mrb[0].mxu0
    %v448 = vadd.f32 %v124, %v447
    %v449 = vpop.f32.mrb[0].mxu0
    %450 = vmatprep.mubr.bf16.mxu0 0
    %451 = vmatmul.mubr.bf16.gmra.mrb[0].mxu0 %v352
    %v452 = vpop.f32.mrb[0].mxu0
    %v453 = vadd.f32 %v129, %v452
    %v454 = vpop.f32.mrb[0].mxu0
    %v455 = vpop.f32.mrb[0].mxu0
    %v456 = vadd.f32 %v134, %v455
    %v457 = vpop.f32.mrb[0].mxu0
    %458 = vmatprep.mubr.bf16.mxu0 0
    %459 = vmatmul.mubr.bf16.gmra.mrb[0].mxu0 %v355
    %v460 = vpop.f32.mrb[0].mxu0
    %v461 = vadd.f32 %v139, %v460
    %v462 = vpop.f32.mrb[0].mxu0
    %v463 = vpop.f32.mrb[0].mxu0
    %v464 = vadd.f32 %v144, %v463
    %v465 = vpop.f32.mrb[0].mxu0
    %466 = vmatprep.mubr.bf16.mxu0 0
    %467 = vmatmul.mubr.bf16.gmra.mrb[0].mxu0 %v358
    %v468 = vpop.f32.mrb[0].mxu0
    %v469 = vadd.f32 %v149, %v468
    %v470 = vpop.f32.mrb[0].mxu0
    %v471 = vpop.f32.mrb[0].mxu0
    %v472 = vadd.f32 %v154, %v471
    %v473 = vpop.f32.mrb[0].mxu0
    %474 = vmatprep.mubr.bf16.mxu0 0
    %475 = vmatmul.mubr.bf16.gmra.mrb[0].mxu0 %v361
    %v476 = vpop.f32.mrb[0].mxu0
    %v477 = vadd.f32 %v159, %v476
    %v478 = vpop.f32.mrb[0].mxu0
    %v479 = vpop.f32.mrb[0].mxu0
    %v480 = vadd.f32 %v164, %v479
    %v481 = vpop.f32.mrb[0].mxu0
    %482 = vmatprep.mubr.bf16.mxu0 0
    %483 = vmatmul.mubr.bf16.gmra.mrb[0].mxu0 %v364
    %v484 = vpop.f32.mrb[0].mxu0
    %v485 = vadd.f32 %v169, %v484
    %v486 = vpop.f32.mrb[0].mxu0
    %v487 = vpop.f32.mrb[0].mxu0
    %v488 = vadd.f32 %v174, %v487
    %v489 = vpop.f32.mrb[0].mxu0
    %490 = vmatprep.mubr.bf16.mxu0 0
    %491 = vmatmul.mubr.bf16.gmra.mrb[0].mxu0 %v367
    %v492 = vpop.f32.mrb[0].mxu0
    %v493 = vadd.f32 %v179, %v492
    %v494 = vpop.f32.mrb[0].mxu0
    %v495 = vpop.f32.mrb[0].mxu0
    %v496 = vadd.f32 %v184, %v495
    %v497 = vpop.f32.mrb[0].mxu0
    %498 = vmatprep.mubr.bf16.mxu0 0
    %499 = vmatmul.mubr.bf16.gmra.mrb[0].mxu0 %v370
    %v500 = vpop.f32.mrb[0].mxu0
    %v501 = vadd.f32 %v189, %v500
    %v502 = vpop.f32.mrb[0].mxu0
    %v503 = vpop.f32.mrb[0].mxu0
    %v504 = vadd.f32 %v194, %v503
    %v505 = vpop.f32.mrb[0].mxu0
    %506 = vmatprep.mubr.bf16.mxu0 0
    %507 = vmatmul.mubr.bf16.gmra.mrb[0].mxu0 %v373
    %v508 = vpop.f32.mrb[0].mxu0
    %v509 = vadd.f32 %v199, %v508
    %v510 = vpop.f32.mrb[0].mxu0
    %v511 = vpop.f32.mrb[0].mxu0
    %v512 = vadd.f32 %v204, %v511
    %v513 = vpop.f32.mrb[0].mxu0
    %514 = vmatprep.mubr.bf16.mxu0 0
    %515 = vmatmul.mubr.bf16.gmra.mrb[0].mxu0 %v376
    %v516 = vpop.f32.mrb[0].mxu0
    %v517 = vadd.f32 %v209, %v516
    %v518 = vpop.f32.mrb[0].mxu0
    %v519 = vpop.f32.mrb[0].mxu0
    %v520 = vadd.f32 %v214, %v519
    %v521 = vpop.f32.mrb[0].mxu0
    %522 = vmatprep.mubr.bf16.mxu0 0
    %523 = vmatmul.mubr.bf16.gmra.mrb[0].mxu0 %v379
    %v524 = vpop.f32.mrb[0].mxu0
    %v525 = vadd.f32 %v219, %v524
    %v526 = vpop.f32.mrb[0].mxu0
    %v527 = vpop.f32.mrb[0].mxu0
    %v528 = vadd.f32 %v224, %v527
    %v529 = vpop.f32.mrb[0].mxu0
    %530 = vmatprep.mubr.bf16.mxu0 0
    %531 = vmatmul.mubr.bf16.gmra.mrb[0].mxu0 %v382
    %v532 = vpop.f32.mrb[0].mxu0
    %v533 = vadd.f32 %v229, %v532
    %v534 = vpop.f32.mrb[0].mxu0
    %v535 = vpop.f32.mrb[0].mxu0
    %v536 = vadd.f32 %v234, %v535
    %v537 = vpop.f32.mrb[0].mxu0
    %538 = vmatprep.mubr.bf16.mxu0 0
    %539 = vmatmul.mubr.bf16.gmra.mrb[0].mxu0 %v385
    %v540 = vpop.f32.mrb[0].mxu0
    %v541 = vadd.f32 %v239, %v540
    %v542 = vpop.f32.mrb[0].mxu0
    %v543 = vpop.f32.mrb[0].mxu0
    %v544 = vadd.f32 %v244, %v543
    %v545 = vpop.f32.mrb[0].mxu0
    %546 = vmatprep.mubr.bf16.mxu0 0
    %547 = vmatmul.mubr.bf16.gmra.mrb[0].mxu0 %v388
    %v548 = vpop.f32.mrb[0].mxu0
    %v549 = vadd.f32 %v249, %v548
    %v550 = vpop.f32.mrb[0].mxu0
    %v551 = vpop.f32.mrb[0].mxu0
    %v552 = vadd.f32 %v254, %v551
    %v553 = vpop.f32.mrb[0].mxu0
    %554 = vdwg.mxu0
    %v555 = vmax.f32 %v429, 0.0
    %v556 = vmax.f32 %v432, 0.0
    %v557 = vmax.f32 %v437, 0.0
    %v558 = vmax.f32 %v440, 0.0
    %v559 = vmax.f32 %v445, 0.0
    %v560 = vmax.f32 %v448, 0.0
    %v561 = vmax.f32 %v453, 0.0
    %v562 = vmax.f32 %v456, 0.0
    %v563 = vmax.f32 %v461, 0.0
    %v564 = vmax.f32 %v464, 0.0
    %v565 = vmax.f32 %v469, 0.0
    %v566 = vmax.f32 %v472, 0.0
    %v567 = vmax.f32 %v477, 0.0
    %v568 = vmax.f32 %v480, 0.0
    %v569 = vmax.f32 %v485, 0.0
    %v570 = vmax.f32 %v488, 0.0
    %v571 = vmax.f32 %v493, 0.0
    %v572 = vmax.f32 %v496, 0.0
    %v573 = vmax.f32 %v501, 0.0
    %v574 = vmax.f32 %v504, 0.0
    %v575 = vmax.f32 %v509, 0.0
    %v576 = vmax.f32 %v512, 0.0
    %v577 = vmax.f32 %v517, 0.0
    %v578 = vmax.f32 %v520, 0.0
    %v579 = vmax.f32 %v525, 0.0
    %v580 = vmax.f32 %v528, 0.0
    %v581 = vmax.f32 %v533, 0.0
    %v582 = vmax.f32 %v536, 0.0
    %v583 = vmax.f32 %v541, 0.0
    %v584 = vmax.f32 %v544, 0.0
    %v585 = vmax.f32 %v549, 0.0
    %v586 = vmax.f32 %v552, 0.0
    %v587 = vpack.c.bf16 %v556, %v555
    %v588 = vpack.c.bf16 %v558, %v557
    %v589 = vpack.c.bf16 %v560, %v559
    %v590 = vpack.c.bf16 %v562, %v561
    %v591 = vpack.c.bf16 %v564, %v563
    %v592 = vpack.c.bf16 %v566, %v565
    %v593 = vpack.c.bf16 %v568, %v567
    %v594 = vpack.c.bf16 %v570, %v569
    %v595 = vpack.c.bf16 %v572, %v571
    %v596 = vpack.c.bf16 %v574, %v573
    %v597 = vpack.c.bf16 %v576, %v575
    %v598 = vpack.c.bf16 %v578, %v577
    %v599 = vpack.c.bf16 %v580, %v579
    %v600 = vpack.c.bf16 %v582, %v581
    %v601 = vpack.c.bf16 %v584, %v583
    %v602 = vpack.c.bf16 %v586, %v585
    %v603 = vld [vmem:[%s3] sm:$0xff]
    %v604 = vld [vmem:[%s3 + $0x8] sm:$0xff]
    %v605 = vld [vmem:[%s3 + $0x10] sm:$0xff]
    %v606 = vld [vmem:[%s3 + $0x18] sm:$0xff]
    %v607 = vld [vmem:[%s3 + $0x20] sm:$0xff]
    %v608 = vld [vmem:[%s3 + $0x28] sm:$0xff]
    %v609 = vld [vmem:[%s3 + $0x30] sm:$0xff]
    %v610 = vld [vmem:[%s3 + $0x38] sm:$0xff]
    %v611 = vld [vmem:[%s3 + $0x40] sm:$0xff]
    %v612 = vld [vmem:[%s3 + $0x48] sm:$0xff]
    %v613 = vld [vmem:[%s3 + $0x50] sm:$0xff]
    %v614 = vld [vmem:[%s3 + $0x58] sm:$0xff]
    %v615 = vld [vmem:[%s3 + $0x60] sm:$0xff]
    %v616 = vld [vmem:[%s3 + $0x68] sm:$0xff]
    %v617 = vld [vmem:[%s3 + $0x70] sm:$0xff]
    %v618 = vld [vmem:[%s3 + $0x78] sm:$0xff]
    %v619 = vld [vmem:[%s4] sm:$0xff]
    %v620 = vld [vmem:[%s4 + $0x8] sm:$0xff]
    %v621 = vld [vmem:[%s4 + $0x10] sm:$0xff]
    %v622 = vld [vmem:[%s4 + $0x18] sm:$0xff]
    %v623 = vld [vmem:[%s4 + $0x20] sm:$0xff]
    %v624 = vld [vmem:[%s4 + $0x28] sm:$0xff]
    %v625 = vld [vmem:[%s4 + $0x30] sm:$0xff]
    %v626 = vld [vmem:[%s4 + $0x38] sm:$0xff]
    %v627 = vld [vmem:[%s4 + $0x40] sm:$0xff]
    %v628 = vld [vmem:[%s4 + $0x48] sm:$0xff]
    %v629 = vld [vmem:[%s4 + $0x50] sm:$0xff]
    %v630 = vld [vmem:[%s4 + $0x58] sm:$0xff]
    %v631 = vld [vmem:[%s4 + $0x60] sm:$0xff]
    %v632 = vld [vmem:[%s4 + $0x68] sm:$0xff]
    %v633 = vld [vmem:[%s4 + $0x70] sm:$0xff]
    %v634 = vld [vmem:[%s4 + $0x78] sm:$0xff]
    %636 = vset.pattern.permute.xlu0 0
    %637 = vperm.xlu0 %636, %v619
    %v638 = vpop.permute.xlu0 %637
    %641 = vset.pattern.permute.xlu0 0
    %642 = vperm.xlu0 %641, %v620
    %v643 = vpop.permute.xlu0 %642
    %646 = vset.pattern.permute.xlu0 0
    %647 = vperm.xlu0 %646, %v621
    %v648 = vpop.permute.xlu0 %647
    %651 = vset.pattern.permute.xlu0 0
    %652 = vperm.xlu0 %651, %v622
    %v653 = vpop.permute.xlu0 %652
    %656 = vset.pattern.permute.xlu0 0
    %657 = vperm.xlu0 %656, %v623
    %v658 = vpop.permute.xlu0 %657
    %661 = vset.pattern.permute.xlu0 0
    %662 = vperm.xlu0 %661, %v624
    %v663 = vpop.permute.xlu0 %662
    %666 = vset.pattern.permute.xlu0 0
    %667 = vperm.xlu0 %666, %v625
    %v668 = vpop.permute.xlu0 %667
    %671 = vset.pattern.permute.xlu0 0
    %672 = vperm.xlu0 %671, %v626
    %v673 = vpop.permute.xlu0 %672
    %676 = vset.pattern.permute.xlu0 0
    %677 = vperm.xlu0 %676, %v627
    %v678 = vpop.permute.xlu0 %677
    %681 = vset.pattern.permute.xlu0 0
    %682 = vperm.xlu0 %681, %v628
    %v683 = vpop.permute.xlu0 %682
    %686 = vset.pattern.permute.xlu0 0
    %687 = vperm.xlu0 %686, %v629
    %v688 = vpop.permute.xlu0 %687
    %691 = vset.pattern.permute.xlu0 0
    %692 = vperm.xlu0 %691, %v630
    %v693 = vpop.permute.xlu0 %692
    %696 = vset.pattern.permute.xlu0 0
    %697 = vperm.xlu0 %696, %v631
    %v698 = vpop.permute.xlu0 %697
    %701 = vset.pattern.permute.xlu0 0
    %702 = vperm.xlu0 %701, %v632
    %v703 = vpop.permute.xlu0 %702
    %706 = vset.pattern.permute.xlu0 0
    %707 = vperm.xlu0 %706, %v633
    %v708 = vpop.permute.xlu0 %707
    %711 = vset.pattern.permute.xlu0 0
    %712 = vperm.xlu0 %711, %v634
    %v713 = vpop.permute.xlu0 %712
    %v731 = vunpack.c.l.b16 %v603
    %v732 = vunpack.c.h.b16 %v603
    %v733 = vunpack.c.l.b16 %v604
    %v734 = vunpack.c.h.b16 %v604
    %v735 = vunpack.c.l.b16 %v605
    %v736 = vunpack.c.h.b16 %v605
    %v737 = vunpack.c.l.b16 %v606
    %v738 = vunpack.c.h.b16 %v606
    %v739 = vunpack.c.l.b16 %v607
    %v740 = vunpack.c.h.b16 %v607
    %v741 = vunpack.c.l.b16 %v608
    %v742 = vunpack.c.h.b16 %v608
    %v743 = vunpack.c.l.b16 %v609
    %v744 = vunpack.c.h.b16 %v609
    %v745 = vunpack.c.l.b16 %v610
    %v746 = vunpack.c.h.b16 %v610
    %v747 = vunpack.c.l.b16 %v611
    %v748 = vunpack.c.h.b16 %v611
    %v749 = vunpack.c.l.b16 %v612
    %v750 = vunpack.c.h.b16 %v612
    %v751 = vunpack.c.l.b16 %v613
    %v752 = vunpack.c.h.b16 %v613
    %v753 = vunpack.c.l.b16 %v614
    %v754 = vunpack.c.h.b16 %v614
    %v755 = vunpack.c.l.b16 %v615
    %v756 = vunpack.c.h.b16 %v615
    %v757 = vunpack.c.l.b16 %v616
    %v758 = vunpack.c.h.b16 %v616
    %v759 = vunpack.c.l.b16 %v617
    %v760 = vunpack.c.h.b16 %v617
    %v761 = vunpack.c.l.b16 %v618
    %v762 = vunpack.c.h.b16 %v618
    %v763 = vpack.c.b16 %v733, %v731
    %v764 = vpack.c.b16 %v734, %v732
    %v765 = vpack.c.b16 %v737, %v735
    %v766 = vpack.c.b16 %v738, %v736
    %v767 = vpack.c.b16 %v741, %v739
    %v768 = vpack.c.b16 %v742, %v740
    %v769 = vpack.c.b16 %v745, %v743
    %v770 = vpack.c.b16 %v746, %v744
    %v771 = vpack.c.b16 %v749, %v747
    %v772 = vpack.c.b16 %v750, %v748
    %v773 = vpack.c.b16 %v753, %v751
    %v774 = vpack.c.b16 %v754, %v752
    %v775 = vpack.c.b16 %v757, %v755
    %v776 = vpack.c.b16 %v758, %v756
    %v777 = vpack.c.b16 %v761, %v759
    %v778 = vpack.c.b16 %v762, %v760
    %795 = vmatprep.subr.bf16.mxu0 0
    %796 = vmatpush1.bf16.msra.mxu0 %v587
    %797 = vmatprep.subr.bf16.mxu0 0
    %798 = vmatpush1.bf16.msra.mxu0 %v588
    %799 = vmatprep.subr.bf16.mxu0 0
    %800 = vmatpush1.bf16.msra.mxu0 %v589
    %801 = vmatprep.subr.bf16.mxu0 0
    %802 = vmatpush1.bf16.msra.mxu0 %v590
    %803 = vmatprep.subr.bf16.mxu0 0
    %804 = vmatpush1.bf16.msra.mxu0 %v591
    %805 = vmatprep.subr.bf16.mxu0 0
    %806 = vmatpush1.bf16.msra.mxu0 %v592
    %807 = vmatprep.subr.bf16.mxu0 0
    %808 = vmatpush1.bf16.msra.mxu0 %v593
    %809 = vmatprep.subr.bf16.mxu0 0
    %810 = vmatpush1.bf16.msra.mxu0 %v594
    %811 = vmatprep.subr.bf16.mxu0 0
    %812 = vmatpush1.bf16.msra.mxu0 %v595
    %813 = vmatprep.subr.bf16.mxu0 0
    %814 = vmatpush1.bf16.msra.mxu0 %v596
    %815 = vmatprep.subr.bf16.mxu0 0
    %816 = vmatpush1.bf16.msra.mxu0 %v597
    %817 = vmatprep.subr.bf16.mxu0 0
    %818 = vmatpush1.bf16.msra.mxu0 %v598
    %819 = vmatprep.subr.bf16.mxu0 0
    %820 = vmatpush1.bf16.msra.mxu0 %v599
    %821 = vmatprep.subr.bf16.mxu0 0
    %822 = vmatpush1.bf16.msra.mxu0 %v600
    %823 = vmatprep.subr.bf16.mxu0 0
    %824 = vmatpush1.bf16.msra.mxu0 %v601
    %825 = vmatprep.subr.bf16.mxu0 0
    %826 = vmatpush1.bf16.msra.mxu0 %v602
    %827 = vmatprep.mubr.bf16.mxu0 %v764
    %828 = vmatmul.mubr.bf16.gmra.mrb[0].mxu0 %v763
    %v829 = vpop.f32.mrb[0].mxu0
    %v830 = vadd.f32 %v638, %v829
    %v831 = vpop.f32.mrb[0].mxu0
    %v832 = vpop.f32.mrb[0].mxu0
    %v833 = vadd.f32 %v643, %v832
    %v834 = vpop.f32.mrb[0].mxu0
    %835 = vmatprep.mubr.bf16.mxu0 %v766
    %836 = vmatmul.mubr.bf16.gmra.mrb[0].mxu0 %v765
    %v837 = vpop.f32.mrb[0].mxu0
    %v838 = vadd.f32 %v648, %v837
    %v839 = vpop.f32.mrb[0].mxu0
    %v840 = vpop.f32.mrb[0].mxu0
    %v841 = vadd.f32 %v653, %v840
    %v842 = vpop.f32.mrb[0].mxu0
    %843 = vmatprep.mubr.bf16.mxu0 %v768
    %844 = vmatmul.mubr.bf16.gmra.mrb[0].mxu0 %v767
    %v845 = vpop.f32.mrb[0].mxu0
    %v846 = vadd.f32 %v658, %v845
    %v847 = vpop.f32.mrb[0].mxu0
    %v848 = vpop.f32.mrb[0].mxu0
    %v849 = vadd.f32 %v663, %v848
    %v850 = vpop.f32.mrb[0].mxu0
    %851 = vmatprep.mubr.bf16.mxu0 %v770
    %852 = vmatmul.mubr.bf16.gmra.mrb[0].mxu0 %v769
    %v853 = vpop.f32.mrb[0].mxu0
    %v854 = vadd.f32 %v668, %v853
    %v855 = vpop.f32.mrb[0].mxu0
    %v856 = vpop.f32.mrb[0].mxu0
    %v857 = vadd.f32 %v673, %v856
    %v858 = vpop.f32.mrb[0].mxu0
    %859 = vmatprep.mubr.bf16.mxu0 %v772
    %860 = vmatmul.mubr.bf16.gmra.mrb[0].mxu0 %v771
    %v861 = vpop.f32.mrb[0].mxu0
    %v862 = vadd.f32 %v678, %v861
    %v863 = vpop.f32.mrb[0].mxu0
    %v864 = vpop.f32.mrb[0].mxu0
    %v865 = vadd.f32 %v683, %v864
    %v866 = vpop.f32.mrb[0].mxu0
    %867 = vmatprep.mubr.bf16.mxu0 %v774
    %868 = vmatmul.mubr.bf16.gmra.mrb[0].mxu0 %v773
    %v869 = vpop.f32.mrb[0].mxu0
    %v870 = vadd.f32 %v688, %v869
    %v871 = vpop.f32.mrb[0].mxu0
    %v872 = vpop.f32.mrb[0].mxu0
    %v873 = vadd.f32 %v693, %v872
    %v874 = vpop.f32.mrb[0].mxu0
    %875 = vmatprep.mubr.bf16.mxu0 %v776
    %876 = vmatmul.mubr.bf16.gmra.mrb[0].mxu0 %v775
    %v877 = vpop.f32.mrb[0].mxu0
    %v878 = vadd.f32 %v698, %v877
    %v879 = vpop.f32.mrb[0].mxu0
    %v880 = vpop.f32.mrb[0].mxu0
    %v881 = vadd.f32 %v703, %v880
    %v882 = vpop.f32.mrb[0].mxu0
    %883 = vmatprep.mubr.bf16.mxu0 %v778
    %884 = vmatmul.mubr.bf16.gmra.mrb[0].mxu0 %v777
    %v885 = vpop.f32.mrb[0].mxu0
    %v886 = vadd.f32 %v708, %v885
    %v887 = vpop.f32.mrb[0].mxu0
    %v888 = vpop.f32.mrb[0].mxu0
    %v889 = vadd.f32 %v713, %v888
    %v890 = vpop.f32.mrb[0].mxu0
    %891 = vdwg.mxu0
    %v892 = vmax.f32 %v830, 0.0
    %v893 = vmax.f32 %v833, 0.0
    %v894 = vmax.f32 %v838, 0.0
    %v895 = vmax.f32 %v841, 0.0
    %v896 = vmax.f32 %v846, 0.0
    %v897 = vmax.f32 %v849, 0.0
    %v898 = vmax.f32 %v854, 0.0
    %v899 = vmax.f32 %v857, 0.0
    %v900 = vmax.f32 %v862, 0.0
    %v901 = vmax.f32 %v865, 0.0
    %v902 = vmax.f32 %v870, 0.0
    %v903 = vmax.f32 %v873, 0.0
    %v904 = vmax.f32 %v878, 0.0
    %v905 = vmax.f32 %v881, 0.0
    %v906 = vmax.f32 %v886, 0.0
    %v907 = vmax.f32 %v889, 0.0
    %v908 = vld [vmem:[%s5] sm:$0xff]
    %v909 = vld [vmem:[%s5 + $0x8] sm:$0xff]
    %v910 = vld [vmem:[%s5 + $0x10] sm:$0xff]
    %v911 = vld [vmem:[%s5 + $0x18] sm:$0xff]
    %v912 = vld [vmem:[%s5 + $0x20] sm:$0xff]
    %v913 = vld [vmem:[%s5 + $0x28] sm:$0xff]
    %v914 = vld [vmem:[%s5 + $0x30] sm:$0xff]
    %v915 = vld [vmem:[%s5 + $0x38] sm:$0xff]
    %v916 = vld [vmem:[%s5 + $0x40] sm:$0xff]
    %v917 = vld [vmem:[%s5 + $0x48] sm:$0xff]
    %v918 = vld [vmem:[%s5 + $0x50] sm:$0xff]
    %v919 = vld [vmem:[%s5 + $0x58] sm:$0xff]
    %v920 = vld [vmem:[%s5 + $0x60] sm:$0xff]
    %v921 = vld [vmem:[%s5 + $0x68] sm:$0xff]
    %v922 = vld [vmem:[%s5 + $0x70] sm:$0xff]
    %v923 = vld [vmem:[%s5 + $0x78] sm:$0xff]
    %925 = vset.pattern.permute.xlu0 0
    %926 = vperm.xlu0 %925, %v908
    %v927 = vpop.permute.xlu0 %926
    %930 = vset.pattern.permute.xlu0 0
    %931 = vperm.xlu0 %930, %v909
    %v932 = vpop.permute.xlu0 %931
    %935 = vset.pattern.permute.xlu0 0
    %936 = vperm.xlu0 %935, %v910
    %v937 = vpop.permute.xlu0 %936
    %940 = vset.pattern.permute.xlu0 0
    %941 = vperm.xlu0 %940, %v911
    %v942 = vpop.permute.xlu0 %941
    %945 = vset.pattern.permute.xlu0 0
    %946 = vperm.xlu0 %945, %v912
    %v947 = vpop.permute.xlu0 %946
    %950 = vset.pattern.permute.xlu0 0
    %951 = vperm.xlu0 %950, %v913
    %v952 = vpop.permute.xlu0 %951
    %955 = vset.pattern.permute.xlu0 0
    %956 = vperm.xlu0 %955, %v914
    %v957 = vpop.permute.xlu0 %956
    %960 = vset.pattern.permute.xlu0 0
    %961 = vperm.xlu0 %960, %v915
    %v962 = vpop.permute.xlu0 %961
    %965 = vset.pattern.permute.xlu0 0
    %966 = vperm.xlu0 %965, %v916
    %v967 = vpop.permute.xlu0 %966
    %970 = vset.pattern.permute.xlu0 0
    %971 = vperm.xlu0 %970, %v917
    %v972 = vpop.permute.xlu0 %971
    %975 = vset.pattern.permute.xlu0 0
    %976 = vperm.xlu0 %975, %v918
    %v977 = vpop.permute.xlu0 %976
    %980 = vset.pattern.permute.xlu0 0
    %981 = vperm.xlu0 %980, %v919
    %v982 = vpop.permute.xlu0 %981
    %985 = vset.pattern.permute.xlu0 0
    %986 = vperm.xlu0 %985, %v920
    %v987 = vpop.permute.xlu0 %986
    %990 = vset.pattern.permute.xlu0 0
    %991 = vperm.xlu0 %990, %v921
    %v992 = vpop.permute.xlu0 %991
    %995 = vset.pattern.permute.xlu0 0
    %996 = vperm.xlu0 %995, %v922
    %v997 = vpop.permute.xlu0 %996
    %1000 = vset.pattern.permute.xlu0 0
    %1001 = vperm.xlu0 %1000, %v923
    %v1002 = vpop.permute.xlu0 %1001
    %v1004 = vmul.f32 %v892, %v927
    %v1005 = vmul.f32 %v893, %v932
    %v1006 = vmul.f32 %v894, %v937
    %v1007 = vmul.f32 %v895, %v942
    %v1008 = vmul.f32 %v896, %v947
    %v1009 = vmul.f32 %v897, %v952
    %v1010 = vmul.f32 %v898, %v957
    %v1011 = vmul.f32 %v899, %v962
    %v1012 = vmul.f32 %v900, %v967
    %v1013 = vmul.f32 %v901, %v972
    %v1014 = vmul.f32 %v902, %v977
    %v1015 = vmul.f32 %v903, %v982
    %v1016 = vmul.f32 %v904, %v987
    %v1017 = vmul.f32 %v905, %v992
    %v1018 = vmul.f32 %v906, %v997
    %v1019 = vmul.f32 %v907, %v1002
    %v1020 = vadd.f32 %v1004, %v1005
    %v1021 = vadd.f32 %v1020, %v1006
    %v1022 = vadd.f32 %v1021, %v1007
    %v1023 = vadd.f32 %v1022, %v1008
    %v1024 = vadd.f32 %v1023, %v1009
    %v1025 = vadd.f32 %v1024, %v1010
    %v1026 = vadd.f32 %v1025, %v1011
    %v1027 = vadd.f32 %v1026, %v1012
    %v1028 = vadd.f32 %v1027, %v1013
    %v1029 = vadd.f32 %v1028, %v1014
    %v1030 = vadd.f32 %v1029, %v1015
    %v1031 = vadd.f32 %v1030, %v1016
    %v1032 = vadd.f32 %v1031, %v1017
    %v1033 = vadd.f32 %v1032, %v1018
    %v1034 = vadd.f32 %v1033, %v1019
    %v1035 = vrot.slane %v1034, 4
    %v1036 = vadd.f32 %v1034, %v1035
    %v1037 = vrot.slane %v1036, 2
    %v1038 = vadd.f32 %v1036, %v1037
    %v1039 = vrot.slane %v1038, 1
    %v1040 = vadd.f32 %v1038, %v1039
    %v1041 = vld [vmem:[#allocation2] sm:$0x1]
    %1043 = vset.pattern.permute.xlu0 0
    %1044 = vperm.xlu0 %1043, %v1041
    %v1045 = vpop.permute.xlu0 %1044
    %v1047 = vlaneseq
    %v1048 = vshrl.u32 %v1047, 7
    %v1049 = vsub.s32 0, %v1048
    %v1050 = vrot.slane %v1045, %v1049
    %v1051 = vadd.f32 %v1040, %v1050
    %v1052 = vsub.f32 0.0, %v1051
    %v1053 = vmul.f32 %v1052, 1.442695
    %v1054 = vpow.pop %v1053
    %v1055 = vadd.f32 %v1054, 1.0
    %v1056 = vrcp.pop %v1055
    %1057 = vst [vmem:[#allocation3] sm:$0x1] %v1056
    // Predicated region
    $region30: #{tpu_custom_call.1} parent=1 // pred_check
      _
    $region31: #{tpu_custom_call.1} parent=1 // pred_check_branch
      %1059 = sbr.rel (0) target = $region33
    $region32: #{tpu_custom_call.1} parent=1 // pred_region
      %s1061 = ssub.s32 16, 16
      %1062 = vsyncadd [#allocation4], %s1061
      %s1064 = sshll.u32 [#allocation3], 4
      %s1065 = int_to_ptr.vmem [resolvable:$true] %s1064
      %1067 = dma.vmem_to_hbm [thread:$0]  %s1065, 16, %s7, [#allocation4]
    $region33: #{tpu_custom_call.1} parent=1 // pred_fallthru
      _
    // Predicated region
    $region34: #{tpu_custom_call.1} parent=1 // pred_check
      _
    $region35: #{tpu_custom_call.1} parent=1 // pred_check_branch
      %1069 = sbr.rel (0) target = $region37
    $region36: #{tpu_custom_call.1} parent=1 // pred_region
      %1070 = dma.done [#allocation4], 16
    $region37: #{tpu_custom_call.1} parent=1 // pred_fallthru
      _
    %1071 = vsyncpa [#allocation4], 1

</llo_original>
